<compile_context>
chip_gen: v6e
topology: v6e:2x2x1
jax: 0.10.0
libtpu: 0.0.40
codegen_flags: <defaults>
</compile_context>

<pallas_src>
import math

import jax
import jax.numpy as jnp
from jax.experimental import pallas as pl
from jax.experimental.pallas import tpu as pltpu


_MAX_BLOCK_BYTES = 4 * 1024 * 1024     # 4 MiB blocks; dbl-buffered in+out = 16 MiB live
_VMEM_LIMIT_BYTES = 32 * 1024 * 1024   # explicit scoped limit (v5e default is only 16 MiB)


def _identity_kernel(x_ref, o_ref):
    # One lane-dense, sublane-dense (block_rows, cols) tile resident in VMEM.
    o_ref[...] = x_ref[...]


def _sublane_multiple(itemsize: int) -> int:
    # Native packed-tiling sublane counts: f32 -> 8, bf16 -> 16, int8/fp8 -> 32.
    return {4: 8, 2: 16, 1: 32}.get(itemsize, 8)


def _pick_cols(total: int, sub: int):
    """Largest lane-dense column count (multiple of 128) dividing `total`,
    preferring choices whose row count (total // cols) is sublane-dense."""
    best_any = None
    for c in (4096, 2048, 1024, 512, 256, 128):
        if total % c:
            continue
        if (total // c) % sub == 0:
            return c                      # lane-dense AND sublane-dense rows
        if best_any is None:
            best_any = c                  # lane-dense only
    return best_any


def _pick_block_rows(rows: int, cols: int, itemsize: int, sub: int) -> int:
    """Row-block that is a multiple of `sub` (unless it spans the full extent),
    keeps one block <= _MAX_BLOCK_BYTES, and yields >= 2 grid steps when the
    row count allows it (so the parallel axis can shard across v7x's 2 TCs)."""
    cap = _MAX_BLOCK_BYTES // (cols * itemsize)
    cap = max(sub, (cap // sub) * sub)
    block_rows = min(rows, cap)
    if block_rows < rows and block_rows % sub:
        block_rows = max(sub, (block_rows // sub) * sub)
    if block_rows >= rows and rows >= 2 * sub:
        # Whole array would be one block; split so the grid has >= 2 steps.
        half = -(-rows // 2)
        block_rows = max(sub, -(-half // sub) * sub)
    return block_rows


def _identity_copy_2d(x2d: jax.Array, block_rows: int) -> jax.Array:
    rows, cols = x2d.shape
    itemsize = jnp.dtype(x2d.dtype).itemsize
    grid = (pl.cdiv(rows, block_rows),)   # partial final block is masked by Pallas
    return pl.pallas_call(
        _identity_kernel,
        out_shape=jax.ShapeDtypeStruct((rows, cols), x2d.dtype),
        grid_spec=pl.GridSpec(
            grid=grid,
            in_specs=[pl.BlockSpec((block_rows, cols), lambda i: (i, 0))],
            out_specs=pl.BlockSpec((block_rows, cols), lambda i: (i, 0)),
        ),
        cost_estimate=pl.CostEstimate(
            flops=0,
            transcendentals=0,
            bytes_accessed=2 * rows * cols * itemsize,
        ),
        compiler_params=pltpu.CompilerParams(
            dimension_semantics=("parallel",),
            vmem_limit_bytes=_VMEM_LIMIT_BYTES,
        ),
    )(x2d)


def mobile_vit_forward(x: jax.Array) -> jax.Array:
    """Pallas implementation of MobileVit.forward (stub -> identity).

    The input is viewed as a lane-dense, sublane-dense 2-D slab, copied through
    VMEM in ~4 MiB blocks, and reshaped back to the original layout.
    """
    orig_shape = x.shape
    total = math.prod(orig_shape)
    itemsize = jnp.dtype(x.dtype).itemsize
    sub = _sublane_multiple(itemsize)

    cols = _pick_cols(total, sub)
    if cols is None:
        # TODO(synk): element count not a multiple of 128 lanes; the stub
        # forward defines no computation, so return the input directly rather
        # than emitting a masked whole-array copy (which risks VMEM OOM).
        return x

    rows = total // cols
    block_rows = _pick_block_rows(rows, cols, itemsize, sub)
    x2d = x.reshape(rows, cols)
    y2d = _identity_copy_2d(x2d, block_rows)
    return y2d.reshape(orig_shape)


if __name__ == "__main__":
    key = jax.random.PRNGKey(0)
    # Small NCHW input consistent with a vision module: batch=2, C=4, 16x16.
    x = jax.random.normal(key, (2, 4, 16, 16), dtype=jnp.float32)

    y = mobile_vit_forward(x)
    jax.block_until_ready(y)

    # Sanity check: identity semantics (the stub forward defines no transform).
    assert y.shape == x.shape and y.dtype == x.dtype
    assert bool(jnp.all(y == x))

    print("KERNEL_OK")
</pallas_src>

<mosaic_0001>
module attributes {stable_mosaic.version = 11 : i64} {
  func.func @_identity_kernel(%arg0: i32, %arg1: memref<8x256xf32, #tpu.memory_space<vmem>>, %arg2: memref<8x256xf32, #tpu.memory_space<vmem>>) attributes {dimension_semantics = [#tpu.dimension_semantics<parallel>], iteration_bounds = array<i64: 1>, scalar_prefetch = 0 : i64, scratch_operands = 0 : i64, tpu.core_type = #tpu.core_type<tc>, window_params = [{transform_indices = @transform_0, window_bounds = array<i64: 8, 256>}, {transform_indices = @transform_1, window_bounds = array<i64: 8, 256>}]} {
    %c0 = arith.constant 0 : index
    %c0_0 = arith.constant 0 : index
    %0 = vector.load %arg1[%c0, %c0_0] : memref<8x256xf32, #tpu.memory_space<vmem>>, vector<8x256xf32>
    %c0_1 = arith.constant 0 : index
    %c0_2 = arith.constant 0 : index
    %1 = vector.load %arg2[%c0_1, %c0_2] : memref<8x256xf32, #tpu.memory_space<vmem>>, vector<8x256xf32>
    tpu.vector_store %arg2[%c0_1, %c0_2], %0 {strides = array<i32>} : memref<8x256xf32, #tpu.memory_space<vmem>>, vector<8x256xf32>,
    return
  }
  func.func @transform_0(%arg0: i32) -> (i32, i32) {
    %c0_i32 = arith.constant 0 : i32
    %c0_i32_0 = arith.constant 0 : i32
    return %arg0, %c0_i32 : i32, i32
  }
  func.func @transform_1(%arg0: i32) -> (i32, i32) {
    %c0_i32 = arith.constant 0 : i32
    %c0_i32_0 = arith.constant 0 : i32
    return %arg0, %c0_i32 : i32, i32
  }
}

</mosaic_0001>

<llo_original>
// kernel: tpu_custom_call.1
$region0: #{tpu_custom_call.1}
  #allocation0 [shape = 'u32[]', space=smem, size = 0x4, offset = 0x4, fixed_abs, tag = 'smem constant byte address 0x4 - core index']
  #allocation1 [shape = 'u32[144,128]{1,0:T(1,128)}', space=vmem, size = 0x12000, scoped, tag = 'internal scratch']
  %s0 = inlined_call_operand.hbm [shape: f32[8,256], index: 0, kind: input, shape index: {}]
  %s1 = inlined_call_operand.hbm [shape: f32[8,256], index: 1, kind: output, shape index: {}]
  %s2 = sld [smem:[#allocation0]]
  $region18: #{tpu_custom_call.1} parent=0
    _
  %s4 = ssub.s32 1, %s2
  %s5 = scalar_select 0, %s4, %s2
  $region1: #{tpu_custom_call.1} parent=0
    #allocation2 [shape = 'u8[8192]{0}', space=vmem, size = 0x2000, scoped, tag = 'input window, operand 0, single buffered']
    #allocation3 [shape = 's32[1]{0}', space=sflag, size = 0x4, scoped, tag = 'scoped memory for tpu_custom_call.1']
    #allocation4 [shape = 's32[1]{0}', space=sflag, size = 0x4, scoped, tag = 'scoped memory for tpu_custom_call.1']
    #allocation5 [shape = 'u8[8192]{0}', space=vmem, size = 0x2000, scoped, tag = 'output window, operand 0, single buffered']
    %6 = vsyncpa [#allocation3], 0
    %7 = vsyncpa [#allocation4], 0
    // Predicated region
    $region2: #{tpu_custom_call.1} parent=1 // pred_check
      _
    $region3: #{tpu_custom_call.1} parent=1 // pred_check_branch
      %9 = sbr.rel (0) target = $region5
    $region4: #{tpu_custom_call.1} parent=1 // pred_region
      %s11 = ssub.s32 256, 256
      %12 = vsyncadd [#allocation3], %s11
      %s14 = sshll.u32 [#allocation2], 4
      %s15 = int_to_ptr.vmem [resolvable:$true] %s14
      %17 = dma.hbm_to_vmem [thread:$0]  %s0, 256, %s15, [#allocation3]
    $region5: #{tpu_custom_call.1} parent=1 // pred_fallthru
      _
    // Predicated region
    $region6: #{tpu_custom_call.1} parent=1 // pred_check
      _
    $region7: #{tpu_custom_call.1} parent=1 // pred_check_branch
      %19 = sbr.rel (0) target = $region9
    $region8: #{tpu_custom_call.1} parent=1 // pred_region
      %20 = dma.done [#allocation3], 256
    $region9: #{tpu_custom_call.1} parent=1 // pred_fallthru
      _
    %v21 = vld [vmem:[#allocation2] sm:$0xff]
    %v22 = vld [vmem:[#allocation2 + $0x8] sm:$0xff]
    %23 = vst [vmem:[#allocation5] sm:$0xff] %v21
    %24 = vst [vmem:[#allocation5 + $0x8] sm:$0xff] %v22
    // Predicated region
    $region10: #{tpu_custom_call.1} parent=1 // pred_check
      _
    $region11: #{tpu_custom_call.1} parent=1 // pred_check_branch
      %26 = sbr.rel (0) target = $region13
    $region12: #{tpu_custom_call.1} parent=1 // pred_region
      %s28 = ssub.s32 256, 256
      %29 = vsyncadd [#allocation4], %s28
      %s31 = sshll.u32 [#allocation5], 4
      %s32 = int_to_ptr.vmem [resolvable:$true] %s31
      %34 = dma.vmem_to_hbm [thread:$0]  %s32, 256, %s1, [#allocation4]
    $region13: #{tpu_custom_call.1} parent=1 // pred_fallthru
      _
    // Predicated region
    $region14: #{tpu_custom_call.1} parent=1 // pred_check
      _
    $region15: #{tpu_custom_call.1} parent=1 // pred_check_branch
      %36 = sbr.rel (0) target = $region17
    $region16: #{tpu_custom_call.1} parent=1 // pred_region
      %37 = dma.done [#allocation4], 256
    $region17: #{tpu_custom_call.1} parent=1 // pred_fallthru
      _
    %38 = vsyncpa [#allocation3], 1
    %39 = vsyncpa [#allocation4], 1

</llo_original>
